<compile_context>
chip_gen: v7x
topology: tpu7x:2x2x1
jax: 0.10.0
libtpu: 0.0.40
codegen_flags: <defaults>
</compile_context>

<pallas_src>
import numpy as np
import jax
import jax.numpy as jnp
from jax.experimental import pallas as pl
from jax.experimental.pallas import tpu as pltpu

FIN_KEYS = ["shooting", "turnover", "rebounding", "defense", "ft_foul", "game_control"]
FIN_FEATS = {"shooting": 2, "turnover": 2, "rebounding": 2,
             "defense": 3, "ft_foul": 3, "game_control": 4}
FIN_OUT = 16
HIDDEN = [128, 64]

PER_TEAM_IN = sum(FIN_FEATS[k] for k in FIN_KEYS)        # 16
PER_TEAM_OUT = FIN_OUT * len(FIN_KEYS)                   # 96
TOTAL_IN = 2 * PER_TEAM_IN                               # 32
COMBINED = 2 * PER_TEAM_OUT                              # 192


def _round_up(x, m):
    return ((x + m - 1) // m) * m


def init_params(key):
    """Deterministic synthetic parameters (PyTorch-style uniform fan-in init)."""
    params = {}
    ks = jax.random.split(key, 2 * len(FIN_KEYS) + 6)
    i = 0
    for k in FIN_KEYS:
        f = FIN_FEATS[k]
        bound = 1.0 / np.sqrt(f)
        params[f"fin_{k}_w"] = jax.random.uniform(ks[i], (f, FIN_OUT), jnp.float32, -bound, bound); i += 1
        params[f"fin_{k}_b"] = jax.random.uniform(ks[i], (FIN_OUT,), jnp.float32, -bound, bound); i += 1
    dims = [COMBINED, HIDDEN[0], HIDDEN[1], 1]
    for li in range(3):
        fan_in = dims[li]
        bound = 1.0 / np.sqrt(fan_in)
        params[f"cls_w{li}"] = jax.random.uniform(ks[i], (fan_in, dims[li + 1]), jnp.float32, -bound, bound); i += 1
        params[f"cls_b{li}"] = jax.random.uniform(ks[i], (dims[li + 1],), jnp.float32, -bound, bound); i += 1
    return params


def pack_team_block_diag(params):
    """All 12 FIN linears (6 categories x 2 teams) as ONE block-diagonal (32, 192) weight + bias."""
    w = jnp.zeros((TOTAL_IN, COMBINED), jnp.float32)
    b = jnp.zeros((COMBINED,), jnp.float32)
    for t in range(2):                                    # team A rows 0..15, team B rows 16..31
        r = t * PER_TEAM_IN
        c0 = t * PER_TEAM_OUT
        for ci, k in enumerate(FIN_KEYS):
            f = FIN_FEATS[k]
            cs = c0 + ci * FIN_OUT
            w = w.at[r:r + f, cs:cs + FIN_OUT].set(params[f"fin_{k}_w"])
            b = b.at[cs:cs + FIN_OUT].set(params[f"fin_{k}_b"])
            r += f
    return w, b                                           # (32, 192), (192,)


def _predictor_kernel(xT_ref, wt_ref, bt_ref, w1_ref, b1_ref,
                      w2_ref, b2_ref, w3_ref, b3_ref, o_ref):
    cdt = wt_ref.dtype                                    # compute dtype (bf16 or f32)

    # FIN stage for BOTH teams in one MXU dot: block-diagonal (192, 32) weight applied to the
    # feature-major (32, TM) activation tile, + bias + ReLU.  f32 accumulation.
    h = jnp.dot(wt_ref[...], xT_ref[...], preferred_element_type=jnp.float32)
    h = jnp.maximum(h + bt_ref[...], 0.0)                 # (192, TM) f32

    # classifier layer 1: Linear(192, 128) + ReLU (+ Dropout(0.2) == identity in forward/eval).
    h = jnp.dot(w1_ref[...], h.astype(cdt), preferred_element_type=jnp.float32)
    h = jnp.maximum(h + b1_ref[...], 0.0)                 # (128, TM) f32

    # classifier layer 2: Linear(128, 64) + ReLU.
    h = jnp.dot(w2_ref[...], h.astype(cdt), preferred_element_type=jnp.float32)
    h = jnp.maximum(h + b2_ref[...], 0.0)                 # (64, TM) f32

    # classifier layer 3: Linear(64, 1) on the VPU/XLU (an N=1 MXU matmul would waste a full
    # RHS push + result-FIFO drain per tile): broadcast-multiply + sublane reduction, all f32.
    logit = jnp.sum(h * w3_ref[...], axis=0, keepdims=True) + b3_ref[...]   # (1, TM)
    o_ref[...] = logit.astype(o_ref.dtype)


def match_outcome_predictor(inputs_team_a, inputs_team_b, params, *,
                            block_m=2048, compute_dtype=jnp.bfloat16):
    # glue: dict -> single (B, 32) raw feature matrix (ModuleDict key order, team A then team B)
    xa = jnp.concatenate([inputs_team_a[k] for k in FIN_KEYS], axis=-1)
    xb = jnp.concatenate([inputs_team_b[k] for k in FIN_KEYS], axis=-1)
    x = jnp.concatenate([xa, xb], axis=-1).astype(jnp.float32)          # (B, 32)
    B = x.shape[0]

    # Batch tile: multiple of 128 lanes (lane-dense stores, no masked vst), big enough to
    # amortize per-grid-step overhead, and always >= 2 tiles so v7x's two TensorCores both work.
    block_m = max(128, _round_up(block_m, 128))
    tm = min(block_m, _round_up(max(pl.cdiv(B, 2), 1), 128))
    num_tiles = max(2, pl.cdiv(B, tm))
    b_pad = num_tiles * tm

    xT = x.T                                                            # (32, B), feature-major
    if b_pad != B:
        xT = jnp.pad(xT, ((0, 0), (0, b_pad - B)))
    xT = xT.astype(compute_dtype)

    # Parameter packing: block-diagonal FIN weight + transposed classifier weights (feature-major).
    w_team, b_team = pack_team_block_diag(params)                       # (32, 192), (192,)
    wt = w_team.T.astype(compute_dtype)                                 # (192, 32)
    bt = b_team[:, None].astype(jnp.float32)                            # (192, 1)
    w1 = params["cls_w0"].T.astype(compute_dtype)                       # (128, 192)
    b1 = params["cls_b0"][:, None].astype(jnp.float32)                  # (128, 1)
    w2 = params["cls_w1"].T.astype(compute_dtype)                       # (64, 128)
    b2 = params["cls_b1"][:, None].astype(jnp.float32)                  # (64, 1)
    w3 = params["cls_w2"].astype(jnp.float32)                           # (64, 1)  VPU path stays f32
    b3 = params["cls_b2"].reshape(1, 1).astype(jnp.float32)             # (1, 1)

    def resident_spec(a):                                 # weights/biases: fetched once, VMEM-resident
        return pl.BlockSpec(a.shape, lambda i: (0, 0))

    operands = (xT, wt, bt, w1, b1, w2, b2, w3, b3)
    in_specs = [pl.BlockSpec((TOTAL_IN, tm), lambda i: (0, i))] + \
               [resident_spec(a) for a in operands[1:]]

    out = pl.pallas_call(
        _predictor_kernel,
        out_shape=jax.ShapeDtypeStruct((1, b_pad), jnp.float32),
        grid=(num_tiles,),
        in_specs=in_specs,
        out_specs=pl.BlockSpec((1, tm), lambda i: (0, i)),
        compiler_params=pltpu.CompilerParams(dimension_semantics=("parallel",)),
    )(*operands)
    return out.reshape(b_pad, 1)[:B]


def _reference(inputs_team_a, inputs_team_b, params):
    def team_embed(inp):
        embs = []
        for k in FIN_KEYS:
            e = jnp.maximum(inp[k] @ params[f"fin_{k}_w"] + params[f"fin_{k}_b"], 0.0)
            embs.append(e)
        return jnp.concatenate(embs, axis=-1)
    feat = jnp.concatenate([team_embed(inputs_team_a), team_embed(inputs_team_b)], axis=-1)
    h = jnp.maximum(feat @ params["cls_w0"] + params["cls_b0"], 0.0)
    h = jnp.maximum(h @ params["cls_w1"] + params["cls_b1"], 0.0)
    return h @ params["cls_w2"] + params["cls_b2"]


def _make_inputs(key, batch):
    dkeys = jax.random.split(key, 2 * len(FIN_KEYS))
    team_a = {k: jax.random.normal(dkeys[i], (batch, FIN_FEATS[k]), jnp.float32)
              for i, k in enumerate(FIN_KEYS)}
    team_b = {k: jax.random.normal(dkeys[len(FIN_KEYS) + i], (batch, FIN_FEATS[k]), jnp.float32)
              for i, k in enumerate(FIN_KEYS)}
    return team_a, team_b


if __name__ == "__main__":
    key = jax.random.PRNGKey(0)
    kp, kd1, kd2 = jax.random.split(key, 3)
    params = init_params(kp)

    # small-shape check: default bf16 compute path (f32 accumulate) -> relaxed tolerance.
    B = 2
    team_a, team_b = _make_inputs(kd1, B)
    out = jax.block_until_ready(match_outcome_predictor(team_a, team_b, params))
    ref = _reference(team_a, team_b, params)
    np.testing.assert_allclose(np.asarray(out), np.asarray(ref), rtol=2e-2, atol=2e-2)
    assert out.shape == (B, 1)

    # ragged multi-tile check on the exact-f32 compute path (strict tolerance).
    B2 = 130
    team_a2, team_b2 = _make_inputs(kd2, B2)
    out2 = jax.block_until_ready(
        match_outcome_predictor(team_a2, team_b2, params, block_m=128,
                                compute_dtype=jnp.float32))
    ref2 = _reference(team_a2, team_b2, params)
    np.testing.assert_allclose(np.asarray(out2), np.asarray(ref2), rtol=1e-5, atol=1e-5)
    assert out2.shape == (B2, 1)

    print("KERNEL_OK")
</pallas_src>

<mosaic_0001>
module attributes {stable_mosaic.version = 11 : i64} {
  func.func @_predictor_kernel(%arg0: i32, %arg1: memref<32x128xbf16, #tpu.memory_space<vmem>>, %arg2: memref<192x32xbf16, #tpu.memory_space<vmem>>, %arg3: memref<192x1xf32, #tpu.memory_space<vmem>>, %arg4: memref<128x192xbf16, #tpu.memory_space<vmem>>, %arg5: memref<128x1xf32, #tpu.memory_space<vmem>>, %arg6: memref<64x128xbf16, #tpu.memory_space<vmem>>, %arg7: memref<64x1xf32, #tpu.memory_space<vmem>>, %arg8: memref<64x1xf32, #tpu.memory_space<vmem>>, %arg9: memref<1x1xf32, #tpu.memory_space<vmem>>, %arg10: memref<1x128xf32, #tpu.memory_space<vmem>>) attributes {dimension_semantics = [#tpu.dimension_semantics<parallel>], iteration_bounds = array<i64: 2>, scalar_prefetch = 0 : i64, scratch_operands = 0 : i64, tpu.core_type = #tpu.core_type<tc>, window_params = [{transform_indices = @transform_0, window_bounds = array<i64: 32, 128>}, {pipeline_mode = #tpu.pipeline_mode<synchronous>, transform_indices = @transform_1, window_bounds = array<i64: 192, 32>}, {pipeline_mode = #tpu.pipeline_mode<synchronous>, transform_indices = @transform_2, window_bounds = array<i64: 192, 1>}, {pipeline_mode = #tpu.pipeline_mode<synchronous>, transform_indices = @transform_3, window_bounds = array<i64: 128, 192>}, {pipeline_mode = #tpu.pipeline_mode<synchronous>, transform_indices = @transform_4, window_bounds = array<i64: 128, 1>}, {pipeline_mode = #tpu.pipeline_mode<synchronous>, transform_indices = @transform_5, window_bounds = array<i64: 64, 128>}, {pipeline_mode = #tpu.pipeline_mode<synchronous>, transform_indices = @transform_6, window_bounds = array<i64: 64, 1>}, {pipeline_mode = #tpu.pipeline_mode<synchronous>, transform_indices = @transform_7, window_bounds = array<i64: 64, 1>}, {pipeline_mode = #tpu.pipeline_mode<synchronous>, transform_indices = @transform_8, window_bounds = array<i64: 1, 1>}, {transform_indices = @transform_9, window_bounds = array<i64: 1, 128>}]} {
    %c0 = arith.constant 0 : index
    %c0_0 = arith.constant 0 : index
    %0 = vector.load %arg2[%c0, %c0_0] : memref<192x32xbf16, #tpu.memory_space<vmem>>, vector<192x32xbf16>
    %c0_1 = arith.constant 0 : index
    %c0_2 = arith.constant 0 : index
    %1 = vector.load %arg1[%c0_1, %c0_2] : memref<32x128xbf16, #tpu.memory_space<vmem>>, vector<32x128xbf16>
    %cst = arith.constant dense<0.000000e+00> : vector<192x128xf32>
    %2 = tpu.matmul %0, %1, %cst {dimension_numbers = #tpu.dot_dimension_numbers<[1], [0], [0], [1], [0, 0, 1, 1], [], []>} : vector<192x32xbf16>, vector<32x128xbf16>, vector<192x128xf32> -> vector<192x128xf32>
    %c0_3 = arith.constant 0 : index
    %c0_4 = arith.constant 0 : index
    %3 = vector.load %arg3[%c0_3, %c0_4] : memref<192x1xf32, #tpu.memory_space<vmem>>, vector<192x1xf32>
    %4 = vector.broadcast %3 : vector<192x1xf32> to vector<192x128xf32>
    %5 = arith.addf %2, %4 : vector<192x128xf32>
    %cst_5 = arith.constant 0.000000e+00 : f32
    %6 = vector.broadcast %cst_5 : f32 to vector<192x128xf32>
    %7 = arith.maximumf %5, %6 : vector<192x128xf32>
    %c0_6 = arith.constant 0 : index
    %c0_7 = arith.constant 0 : index
    %8 = vector.load %arg4[%c0_6, %c0_7] : memref<128x192xbf16, #tpu.memory_space<vmem>>, vector<128x192xbf16>
    %9 = arith.truncf %7 : vector<192x128xf32> to vector<192x128xbf16>
    %cst_8 = arith.constant dense<0.000000e+00> : vector<128x128xf32>
    %10 = tpu.matmul %8, %9, %cst_8 {dimension_numbers = #tpu.dot_dimension_numbers<[1], [0], [0], [1], [0, 0, 1, 1], [], []>} : vector<128x192xbf16>, vector<192x128xbf16>, vector<128x128xf32> -> vector<128x128xf32>
    %c0_9 = arith.constant 0 : index
    %c0_10 = arith.constant 0 : index
    %11 = vector.load %arg5[%c0_9, %c0_10] : memref<128x1xf32, #tpu.memory_space<vmem>>, vector<128x1xf32>
    %12 = vector.broadcast %11 : vector<128x1xf32> to vector<128x128xf32>
    %13 = arith.addf %10, %12 : vector<128x128xf32>
    %cst_11 = arith.constant 0.000000e+00 : f32
    %14 = vector.broadcast %cst_11 : f32 to vector<128x128xf32>
    %15 = arith.maximumf %13, %14 : vector<128x128xf32>
    %c0_12 = arith.constant 0 : index
    %c0_13 = arith.constant 0 : index
    %16 = vector.load %arg6[%c0_12, %c0_13] : memref<64x128xbf16, #tpu.memory_space<vmem>>, vector<64x128xbf16>
    %17 = arith.truncf %15 : vector<128x128xf32> to vector<128x128xbf16>
    %cst_14 = arith.constant dense<0.000000e+00> : vector<64x128xf32>
    %18 = tpu.matmul %16, %17, %cst_14 {dimension_numbers = #tpu.dot_dimension_numbers<[1], [0], [0], [1], [0, 0, 1, 1], [], []>} : vector<64x128xbf16>, vector<128x128xbf16>, vector<64x128xf32> -> vector<64x128xf32>
    %c0_15 = arith.constant 0 : index
    %c0_16 = arith.constant 0 : index
    %19 = vector.load %arg7[%c0_15, %c0_16] : memref<64x1xf32, #tpu.memory_space<vmem>>, vector<64x1xf32>
    %20 = vector.broadcast %19 : vector<64x1xf32> to vector<64x128xf32>
    %21 = arith.addf %18, %20 : vector<64x128xf32>
    %cst_17 = arith.constant 0.000000e+00 : f32
    %22 = vector.broadcast %cst_17 : f32 to vector<64x128xf32>
    %23 = arith.maximumf %21, %22 : vector<64x128xf32>
    %c0_18 = arith.constant 0 : index
    %c0_19 = arith.constant 0 : index
    %24 = vector.load %arg8[%c0_18, %c0_19] : memref<64x1xf32, #tpu.memory_space<vmem>>, vector<64x1xf32>
    %25 = vector.broadcast %24 : vector<64x1xf32> to vector<64x128xf32>
    %26 = arith.mulf %23, %25 : vector<64x128xf32>
    %cst_20 = arith.constant dense<0.000000e+00> : vector<128xf32>
    %27 = vector.multi_reduction <add>, %26, %cst_20 [0] : vector<64x128xf32> to vector<128xf32>
    %28 = vector.shape_cast %27 : vector<128xf32> to vector<1x128xf32>
    %c0_21 = arith.constant 0 : index
    %c0_22 = arith.constant 0 : index
    %29 = vector.load %arg9[%c0_21, %c0_22] : memref<1x1xf32, #tpu.memory_space<vmem>>, vector<1x1xf32>
    %30 = vector.broadcast %29 : vector<1x1xf32> to vector<1x128xf32>
    %31 = arith.addf %28, %30 : vector<1x128xf32>
    %c0_23 = arith.constant 0 : index
    %c0_24 = arith.constant 0 : index
    %32 = vector.load %arg10[%c0_23, %c0_24] : memref<1x128xf32, #tpu.memory_space<vmem>>, vector<1x128xf32>
    tpu.vector_store %arg10[%c0_23, %c0_24], %31 {strides = array<i32>} : memref<1x128xf32, #tpu.memory_space<vmem>>, vector<1x128xf32>,
    return
  }
  func.func @transform_0(%arg0: i32) -> (i32, i32) {
    %c0_i32 = arith.constant 0 : i32
    %c0_i32_0 = arith.constant 0 : i32
    return %c0_i32, %arg0 : i32, i32
  }
  func.func @transform_1(%arg0: i32) -> (i32, i32) {
    %c0_i32 = arith.constant 0 : i32
    %c0_i32_0 = arith.constant 0 : i32
    %c0_i32_1 = arith.constant 0 : i32
    return %c0_i32, %c0_i32_0 : i32, i32
  }
  func.func @transform_2(%arg0: i32) -> (i32, i32) {
    %c0_i32 = arith.constant 0 : i32
    %c0_i32_0 = arith.constant 0 : i32
    %c0_i32_1 = arith.constant 0 : i32
    return %c0_i32, %c0_i32_0 : i32, i32
  }
  func.func @transform_3(%arg0: i32) -> (i32, i32) {
    %c0_i32 = arith.constant 0 : i32
    %c0_i32_0 = arith.constant 0 : i32
    %c0_i32_1 = arith.constant 0 : i32
    return %c0_i32, %c0_i32_0 : i32, i32
  }
  func.func @transform_4(%arg0: i32) -> (i32, i32) {
    %c0_i32 = arith.constant 0 : i32
    %c0_i32_0 = arith.constant 0 : i32
    %c0_i32_1 = arith.constant 0 : i32
    return %c0_i32, %c0_i32_0 : i32, i32
  }
  func.func @transform_5(%arg0: i32) -> (i32, i32) {
    %c0_i32 = arith.constant 0 : i32
    %c0_i32_0 = arith.constant 0 : i32
    %c0_i32_1 = arith.constant 0 : i32
    return %c0_i32, %c0_i32_0 : i32, i32
  }
  func.func @transform_6(%arg0: i32) -> (i32, i32) {
    %c0_i32 = arith.constant 0 : i32
    %c0_i32_0 = arith.constant 0 : i32
    %c0_i32_1 = arith.constant 0 : i32
    return %c0_i32, %c0_i32_0 : i32, i32
  }
  func.func @transform_7(%arg0: i32) -> (i32, i32) {
    %c0_i32 = arith.constant 0 : i32
    %c0_i32_0 = arith.constant 0 : i32
    %c0_i32_1 = arith.constant 0 : i32
    return %c0_i32, %c0_i32_0 : i32, i32
  }
  func.func @transform_8(%arg0: i32) -> (i32, i32) {
    %c0_i32 = arith.constant 0 : i32
    %c0_i32_0 = arith.constant 0 : i32
    %c0_i32_1 = arith.constant 0 : i32
    return %c0_i32, %c0_i32_0 : i32, i32
  }
  func.func @transform_9(%arg0: i32) -> (i32, i32) {
    %c0_i32 = arith.constant 0 : i32
    %c0_i32_0 = arith.constant 0 : i32
    return %c0_i32, %arg0 : i32, i32
  }
}

</mosaic_0001>

<llo_original>
// kernel: tpu_custom_call.1
$region0: #{tpu_custom_call.1}
  #allocation0 [shape = 'u32[]', space=smem, size = 0x4, offset = 0x4, fixed_abs, tag = 'smem constant byte address 0x4 - core index']
  #allocation1 [shape = 'u32[144,128]{1,0:T(1,128)}', space=vmem, size = 0x12000, scoped, tag = 'internal scratch']
  #allocation2 [shape = 'f32[1,1]{1,0:T(1,128)S(1)}', space=vmem, size = 0x200, scoped, tag = 'scoped memory for tpu_custom_call.1']
  %s0 = inlined_call_operand.vmem [shape: bf16[32,256], index: 0, kind: input, shape index: {}]
  %s1 = inlined_call_operand.vmem [shape: bf16[192,32], index: 1, kind: input, shape index: {}]
  %s2 = inlined_call_operand.vmem [shape: f32[192,1], index: 2, kind: input, shape index: {}]
  %s3 = inlined_call_operand.vmem [shape: bf16[128,192], index: 3, kind: input, shape index: {}]
  %s4 = inlined_call_operand.vmem [shape: f32[128,1], index: 4, kind: input, shape index: {}]
  %s5 = inlined_call_operand.vmem [shape: bf16[64,128], index: 5, kind: input, shape index: {}]
  %s6 = inlined_call_operand.vmem [shape: f32[64,1], index: 6, kind: input, shape index: {}]
  %s7 = inlined_call_operand.vmem [shape: f32[64,1], index: 7, kind: input, shape index: {}]
  %s8 = inlined_call_operand.<no memory space> [shape: f32[1,1], index: 8, kind: input, shape index: {}]
  %s9 = inlined_call_operand.hbm [shape: f32[1,256], index: 9, kind: output, shape index: {}]
  %s10 = sld [smem:[#allocation0]]
  $region110: #{tpu_custom_call.1} parent=0
    _
  %s12 = ssub.s32 1, %s10
  %s13 = scalar_select 0, %s12, %s10
  %v14 = vstv %s8
  %15 = vst [vmem:[#allocation2] sm:$0x1] %v14
  $region1: #{tpu_custom_call.1} parent=0
    #allocation3 [shape = 'u8[16384]{0}', space=vmem, size = 0x4000, scoped, tag = 'input window, operand 0']
    #allocation4 [shape = 'u8[1024]{0}', space=vmem, size = 0x400, scoped, tag = 'output window, operand 0']
    #allocation5 [shape = 's32[2]{0}', space=sflag, size = 0x8, scoped, tag = 'scoped memory for tpu_custom_call.1']
    %16 = vsyncpa [#allocation5], 0
    %s17 = scalar_lea.sflag [#allocation5], 1
    %18 = vsyncpa %s17, 0
    loop: start=0, step=1, limit=4
    $region2: #{tpu_custom_call.1} parent=1 // loop_pre_header
      _
    $region3: #{tpu_custom_call.1} parent=1 // loop_header
      %s20 = sphi 0, %s24
      %p21 = scmp.ge.s32.totalorder %s20, 4
      %s30 = sphi 0, %s32
      %s33 = sphi 0, %s30
      %s34 = sphi 0, %s33
      %s50 = sphi 0, %s34
      %s54 = sphi 0, %s54
      %s56 = sphi 0, %s54
      %s57 = sphi 0, %s56
      %s71 = sphi 0, %s57
      %s75 = sphi 0, %s75
      %s77 = sphi 0, %s75
      %s78 = sphi 0, %s77
      %s92 = sphi 0, %s78
      %s96 = sphi 0, %s96
      %s98 = sphi 0, %s96
      %s99 = sphi 0, %s98
      %s113 = sphi 0, %s99
      %s117 = sphi 0, %s117
      %s119 = sphi 0, %s117
      %s120 = sphi 0, %s119
      %s134 = sphi 0, %s120
      %s138 = sphi 0, %s138
      %s140 = sphi 0, %s138
      %s141 = sphi 0, %s140
      %s155 = sphi 0, %s141
      %s159 = sphi 0, %s159
      %s161 = sphi 0, %s159
      %s162 = sphi 0, %s161
      %s176 = sphi 0, %s162
      %s180 = sphi 0, %s180
      %s182 = sphi 0, %s180
      %s183 = sphi 0, %s182
      %s197 = sphi 0, %s183
      %s201 = sphi 0, %s201
      %s203 = sphi 0, %s201
      %s204 = sphi 0, %s203
      %s218 = sphi 0, %s204
      %s224 = sphi 0, %s226
      %s227 = sphi 0, %s224
      %s228 = sphi 0, %s227
      %s244 = sphi 0, %s228
    $region4: #{tpu_custom_call.1} parent=1 // loop_header_branch
      %23 = sbr.rel (%p21) target = $region8
    $region5: #{tpu_custom_call.1} parent=1 // loop_body
      %s25 = ssub.s32 %s20, 1
      %s26 = ssub.s32 %s20, 2
      %s27 = sadd.s32 %s20, 1
      %s28 = ssub.s32 %s20, %s27
      %p29 = scmp.eq.s32.totalorder %s28, 0
      %s31 = sadd.s32 %s30, 1
      %s32 = scalar_select %p29, %s30, %s31
      %p35 = pneg %p29
      %p36 = scmp.eq.s32.totalorder %s20, 1
      %p37 = por %p35, %p36
      %p38 = scmp.ne.s32.totalorder %s30, %s33
      %p39 = scmp.eq.s32.totalorder %s20, 0
      %p40 = por %p38, %p39
      %p41 = scmp.ne.s32.totalorder %s30, %s33
      %p42 = scmp.eq.s32.totalorder %s25, 1
      %p43 = por %p41, %p42
      %p44 = scmp.ne.s32.totalorder %s33, %s34
      %p45 = scmp.eq.s32.totalorder %s25, 0
      %p46 = por %p44, %p45
      %p47 = scmp.ne.s32.totalorder %s33, %s34
      %p48 = scmp.eq.s32.totalorder %s26, 1
      %p49 = por %p47, %p48
      %p51 = scmp.ne.s32.totalorder %s34, %s50
      %p52 = scmp.eq.s32.totalorder %s26, 0
      %p53 = por %p51, %p52
      %s55 = sadd.s32 %s54, 1
      %p58 = scmp.eq.s32.totalorder %s20, 1
      %p59 = scmp.ne.s32.totalorder %s54, %s56
      %p60 = scmp.eq.s32.totalorder %s20, 0
      %p61 = por %p59, %p60
      %p62 = scmp.ne.s32.totalorder %s54, %s56
      %p63 = scmp.eq.s32.totalorder %s25, 1
      %p64 = por %p62, %p63
      %p65 = scmp.ne.s32.totalorder %s56, %s57
      %p66 = scmp.eq.s32.totalorder %s25, 0
      %p67 = por %p65, %p66
      %p68 = scmp.ne.s32.totalorder %s56, %s57
      %p69 = scmp.eq.s32.totalorder %s26, 1
      %p70 = por %p68, %p69
      %p72 = scmp.ne.s32.totalorder %s57, %s71
      %p73 = scmp.eq.s32.totalorder %s26, 0
      %p74 = por %p72, %p73
      %s76 = sadd.s32 %s75, 1
      %p79 = scmp.eq.s32.totalorder %s20, 1
      %p80 = scmp.ne.s32.totalorder %s75, %s77
      %p81 = scmp.eq.s32.totalorder %s20, 0
      %p82 = por %p80, %p81
      %p83 = scmp.ne.s32.totalorder %s75, %s77
      %p84 = scmp.eq.s32.totalorder %s25, 1
      %p85 = por %p83, %p84
      %p86 = scmp.ne.s32.totalorder %s77, %s78
      %p87 = scmp.eq.s32.totalorder %s25, 0
      %p88 = por %p86, %p87
      %p89 = scmp.ne.s32.totalorder %s77, %s78
      %p90 = scmp.eq.s32.totalorder %s26, 1
      %p91 = por %p89, %p90
      %p93 = scmp.ne.s32.totalorder %s78, %s92
      %p94 = scmp.eq.s32.totalorder %s26, 0
      %p95 = por %p93, %p94
      %s97 = sadd.s32 %s96, 1
      %p100 = scmp.eq.s32.totalorder %s20, 1
      %p101 = scmp.ne.s32.totalorder %s96, %s98
      %p102 = scmp.eq.s32.totalorder %s20, 0
      %p103 = por %p101, %p102
      %p104 = scmp.ne.s32.totalorder %s96, %s98
      %p105 = scmp.eq.s32.totalorder %s25, 1
      %p106 = por %p104, %p105
      %p107 = scmp.ne.s32.totalorder %s98, %s99
      %p108 = scmp.eq.s32.totalorder %s25, 0
      %p109 = por %p107, %p108
      %p110 = scmp.ne.s32.totalorder %s98, %s99
      %p111 = scmp.eq.s32.totalorder %s26, 1
      %p112 = por %p110, %p111
      %p114 = scmp.ne.s32.totalorder %s99, %s113
      %p115 = scmp.eq.s32.totalorder %s26, 0
      %p116 = por %p114, %p115
      %s118 = sadd.s32 %s117, 1
      %p121 = scmp.eq.s32.totalorder %s20, 1
      %p122 = scmp.ne.s32.totalorder %s117, %s119
      %p123 = scmp.eq.s32.totalorder %s20, 0
      %p124 = por %p122, %p123
      %p125 = scmp.ne.s32.totalorder %s117, %s119
      %p126 = scmp.eq.s32.totalorder %s25, 1
      %p127 = por %p125, %p126
      %p128 = scmp.ne.s32.totalorder %s119, %s120
      %p129 = scmp.eq.s32.totalorder %s25, 0
      %p130 = por %p128, %p129
      %p131 = scmp.ne.s32.totalorder %s119, %s120
      %p132 = scmp.eq.s32.totalorder %s26, 1
      %p133 = por %p131, %p132
      %p135 = scmp.ne.s32.totalorder %s120, %s134
      %p136 = scmp.eq.s32.totalorder %s26, 0
      %p137 = por %p135, %p136
      %s139 = sadd.s32 %s138, 1
      %p142 = scmp.eq.s32.totalorder %s20, 1
      %p143 = scmp.ne.s32.totalorder %s138, %s140
      %p144 = scmp.eq.s32.totalorder %s20, 0
      %p145 = por %p143, %p144
      %p146 = scmp.ne.s32.totalorder %s138, %s140
      %p147 = scmp.eq.s32.totalorder %s25, 1
      %p148 = por %p146, %p147
      %p149 = scmp.ne.s32.totalorder %s140, %s141
      %p150 = scmp.eq.s32.totalorder %s25, 0
      %p151 = por %p149, %p150
      %p152 = scmp.ne.s32.totalorder %s140, %s141
      %p153 = scmp.eq.s32.totalorder %s26, 1
      %p154 = por %p152, %p153
      %p156 = scmp.ne.s32.totalorder %s141, %s155
      %p157 = scmp.eq.s32.totalorder %s26, 0
      %p158 = por %p156, %p157
      %s160 = sadd.s32 %s159, 1
      %p163 = scmp.eq.s32.totalorder %s20, 1
      %p164 = scmp.ne.s32.totalorder %s159, %s161
      %p165 = scmp.eq.s32.totalorder %s20, 0
      %p166 = por %p164, %p165
      %p167 = scmp.ne.s32.totalorder %s159, %s161
      %p168 = scmp.eq.s32.totalorder %s25, 1
      %p169 = por %p167, %p168
      %p170 = scmp.ne.s32.totalorder %s161, %s162
      %p171 = scmp.eq.s32.totalorder %s25, 0
      %p172 = por %p170, %p171
      %p173 = scmp.ne.s32.totalorder %s161, %s162
      %p174 = scmp.eq.s32.totalorder %s26, 1
      %p175 = por %p173, %p174
      %p177 = scmp.ne.s32.totalorder %s162, %s176
      %p178 = scmp.eq.s32.totalorder %s26, 0
      %p179 = por %p177, %p178
      %s181 = sadd.s32 %s180, 1
      %p184 = scmp.eq.s32.totalorder %s20, 1
      %p185 = scmp.ne.s32.totalorder %s180, %s182
      %p186 = scmp.eq.s32.totalorder %s20, 0
      %p187 = por %p185, %p186
      %p188 = scmp.ne.s32.totalorder %s180, %s182
      %p189 = scmp.eq.s32.totalorder %s25, 1
      %p190 = por %p188, %p189
      %p191 = scmp.ne.s32.totalorder %s182, %s183
      %p192 = scmp.eq.s32.totalorder %s25, 0
      %p193 = por %p191, %p192
      %p194 = scmp.ne.s32.totalorder %s182, %s183
      %p195 = scmp.eq.s32.totalorder %s26, 1
      %p196 = por %p194, %p195
      %p198 = scmp.ne.s32.totalorder %s183, %s197
      %p199 = scmp.eq.s32.totalorder %s26, 0
      %p200 = por %p198, %p199
      %s202 = sadd.s32 %s201, 1
      %p205 = scmp.eq.s32.totalorder %s20, 1
      %p206 = scmp.ne.s32.totalorder %s201, %s203
      %p207 = scmp.eq.s32.totalorder %s20, 0
      %p208 = por %p206, %p207
      %p209 = scmp.ne.s32.totalorder %s201, %s203
      %p210 = scmp.eq.s32.totalorder %s25, 1
      %p211 = por %p209, %p210
      %p212 = scmp.ne.s32.totalorder %s203, %s204
      %p213 = scmp.eq.s32.totalorder %s25, 0
      %p214 = por %p212, %p213
      %p215 = scmp.ne.s32.totalorder %s203, %s204
      %p216 = scmp.eq.s32.totalorder %s26, 1
      %p217 = por %p215, %p216
      %p219 = scmp.ne.s32.totalorder %s204, %s218
      %p220 = scmp.eq.s32.totalorder %s26, 0
      %p221 = por %p219, %p220
      %s222 = ssub.s32 %s20, %s27
      %p223 = scmp.eq.s32.totalorder %s222, 0
      %s225 = sadd.s32 %s224, 1
      %s226 = scalar_select %p223, %s224, %s225
      %p229 = pneg %p223
      %p230 = scmp.eq.s32.totalorder %s20, 1
      %p231 = por %p229, %p230
      %p232 = scmp.ne.s32.totalorder %s224, %s227
      %p233 = scmp.eq.s32.totalorder %s20, 0
      %p234 = por %p232, %p233
      %p235 = scmp.ne.s32.totalorder %s224, %s227
      %p236 = scmp.eq.s32.totalorder %s25, 1
      %p237 = por %p235, %p236
      %p238 = scmp.ne.s32.totalorder %s227, %s228
      %p239 = scmp.eq.s32.totalorder %s25, 0
      %p240 = por %p238, %p239
      %p241 = scmp.ne.s32.totalorder %s227, %s228
      %p242 = scmp.eq.s32.totalorder %s26, 1
      %p243 = por %p241, %p242
      %p245 = scmp.ne.s32.totalorder %s228, %s244
      %p246 = scmp.eq.s32.totalorder %s26, 0
      %p247 = por %p245, %p246
      %p248 = scmp.le.s32.totalorder 1, %s20
      %p249 = scmp.lt.s32.totalorder %s20, 3
      %p250 = pnand %p248, %p249
      %p251 = pneg %p250
      // Predicated region
      $region9: #{tpu_custom_call.1} parent=5 // pred_check
        _
      $region10: #{tpu_custom_call.1} parent=5 // pred_check_branch
        %253 = sbr.rel (%p250) target = $region12
      $region11: #{tpu_custom_call.1} parent=5 // pred_region
        %s254 = ssub.s32 %s20, 1
        // Predicated region
        $region13: #{tpu_custom_call.1} parent=11 // pred_check
          %p255 = pneg %p67
        $region14: #{tpu_custom_call.1} parent=11 // pred_check_branch
          %257 = sbr.rel (%p255) target = $region16
        $region15: #{tpu_custom_call.1} parent=11 // pred_region
          _
        $region16: #{tpu_custom_call.1} parent=11 // pred_fallthru
          _
        // Predicated region
        $region17: #{tpu_custom_call.1} parent=11 // pred_check
          %p258 = pneg %p88
        $region18: #{tpu_custom_call.1} parent=11 // pred_check_branch
          %260 = sbr.rel (%p258) target = $region20
        $region19: #{tpu_custom_call.1} parent=11 // pred_region
          _
        $region20: #{tpu_custom_call.1} parent=11 // pred_fallthru
          _
        // Predicated region
        $region21: #{tpu_custom_call.1} parent=11 // pred_check
          %p261 = pneg %p109
        $region22: #{tpu_custom_call.1} parent=11 // pred_check_branch
          %263 = sbr.rel (%p261) target = $region24
        $region23: #{tpu_custom_call.1} parent=11 // pred_region
          _
        $region24: #{tpu_custom_call.1} parent=11 // pred_fallthru
          _
        // Predicated region
        $region25: #{tpu_custom_call.1} parent=11 // pred_check
          %p264 = pneg %p130
        $region26: #{tpu_custom_call.1} parent=11 // pred_check_branch
          %266 = sbr.rel (%p264) target = $region28
        $region27: #{tpu_custom_call.1} parent=11 // pred_region
          _
        $region28: #{tpu_custom_call.1} parent=11 // pred_fallthru
          _
        // Predicated region
        $region29: #{tpu_custom_call.1} parent=11 // pred_check
          %p267 = pneg %p151
        $region30: #{tpu_custom_call.1} parent=11 // pred_check_branch
          %269 = sbr.rel (%p267) target = $region32
        $region31: #{tpu_custom_call.1} parent=11 // pred_region
          _
        $region32: #{tpu_custom_call.1} parent=11 // pred_fallthru
          _
        // Predicated region
        $region33: #{tpu_custom_call.1} parent=11 // pred_check
          %p270 = pneg %p172
        $region34: #{tpu_custom_call.1} parent=11 // pred_check_branch
          %272 = sbr.rel (%p270) target = $region36
        $region35: #{tpu_custom_call.1} parent=11 // pred_region
          _
        $region36: #{tpu_custom_call.1} parent=11 // pred_fallthru
          _
        // Predicated region
        $region37: #{tpu_custom_call.1} parent=11 // pred_check
          %p273 = pneg %p193
        $region38: #{tpu_custom_call.1} parent=11 // pred_check_branch
          %275 = sbr.rel (%p273) target = $region40
        $region39: #{tpu_custom_call.1} parent=11 // pred_region
          _
        $region40: #{tpu_custom_call.1} parent=11 // pred_fallthru
          _
        // Predicated region
        $region41: #{tpu_custom_call.1} parent=11 // pred_check
          %p276 = pneg %p214
        $region42: #{tpu_custom_call.1} parent=11 // pred_check_branch
          %278 = sbr.rel (%p276) target = $region44
        $region43: #{tpu_custom_call.1} parent=11 // pred_region
          _
        $region44: #{tpu_custom_call.1} parent=11 // pred_fallthru
          _
      $region12: #{tpu_custom_call.1} parent=5 // pred_fallthru
        _
      %p279 = scmp.lt.s32.totalorder %s20, 2
      // Predicated region
      $region45: #{tpu_custom_call.1} parent=5 // pred_check
        %p280 = pneg %p279
      $region46: #{tpu_custom_call.1} parent=5 // pred_check_branch
        %282 = sbr.rel (%p280) target = $region48
      $region47: #{tpu_custom_call.1} parent=5 // pred_region
        // Predicated region
        $region49: #{tpu_custom_call.1} parent=47 // pred_check
          %p283 = pneg %p40
        $region50: #{tpu_custom_call.1} parent=47 // pred_check_branch
          %285 = sbr.rel (%p283) target = $region52
        $region51: #{tpu_custom_call.1} parent=47 // pred_region
          %s286 = sand.u32 %s30, 1
          %s287 = sand.u32 %s30, 1
          %s288 = smul.addr %s287, 16
          %s289 = scalar_lea.vmem [#allocation3], %s288
          %s290 = smul.addr %s20, 4
          %s291 = scalar_lea.vmem %s0, %s290
          // Predicated region
          $region53: #{tpu_custom_call.1} parent=51 // pred_check
            _
          $region54: #{tpu_custom_call.1} parent=51 // pred_check_branch
            %293 = sbr.rel (0) target = $region56
          $region55: #{tpu_custom_call.1} parent=51 // pred_region
            // Predicated region
            $region57: #{tpu_custom_call.1} parent=55 // pred_check
              _
            $region58: #{tpu_custom_call.1} parent=55 // pred_check_branch
              %295 = sbr.rel target = $region60
            $region59: #{tpu_custom_call.1} parent=55 // pred_region
              // Predicated region
              $region72: #{tpu_custom_call.1} parent=59 // pred_check
                _
              $region73: #{tpu_custom_call.1} parent=59 // pred_check_branch
                %316 = sbr.rel (0) target = $region75
              $region74: #{tpu_custom_call.1} parent=59 // pred_region
                loop: start=0, step=1, limit=1
                $region76: #{tpu_custom_call.1} parent=74 // loop_pre_header
                  _
                $region77: #{tpu_custom_call.1} parent=74 // loop_header
                  %s318 = sphi 0, %s322
                  %p319 = scmp.ge.s32.totalorder %s318, 1
                  %s323 = sphi %s291, %s291
                  %s324 = sphi %s289, %s289
                $region78: #{tpu_custom_call.1} parent=74 // loop_header_branch
                  %321 = sbr.rel (%p319) target = $region82
                $region79: #{tpu_custom_call.1} parent=74 // loop_body
                  _
                $region80: #{tpu_custom_call.1} parent=74 // loop_footer
                  %s322 = sadd.s32 1, %s318
                $region81: #{tpu_custom_call.1} parent=74 // loop_footer_branch
                  %317 = sbr.rel target = $region77
                $region82: #{tpu_custom_call.1} parent=74 // loop_exit
                  _
                loop: start=0, step=1, limit=1
                $region83: #{tpu_custom_call.1} parent=74 // loop_pre_header
                  _
                $region84: #{tpu_custom_call.1} parent=74 // loop_header
                  %s327 = sphi 0, %s331
                  %p328 = scmp.ge.s32.totalorder %s327, 1
                  %s332 = sphi %s291, %s291
                  %s333 = sphi %s289, %s289
                $region85: #{tpu_custom_call.1} parent=74 // loop_header_branch
                  %330 = sbr.rel (%p328) target = $region89
                $region86: #{tpu_custom_call.1} parent=74 // loop_body
                  %v334 = vld [vmem:[%s332] sm:$0xf]
                  %335 = vst [vmem:[%s333] sm:$0xf] %v334
                  %v336 = vld [vmem:[%s332 + $0x8] sm:$0xf]
                  %337 = vst [vmem:[%s333 + $0x4] sm:$0xf] %v336
                  %v338 = vld [vmem:[%s332 + $0x10] sm:$0xf]
                  %339 = vst [vmem:[%s333 + $0x8] sm:$0xf] %v338
                  %v340 = vld [vmem:[%s332 + $0x18] sm:$0xf]
                  %341 = vst [vmem:[%s333 + $0xc] sm:$0xf] %v340
                $region87: #{tpu_custom_call.1} parent=74 // loop_footer
                  %s331 = sadd.s32 1, %s327
                $region88: #{tpu_custom_call.1} parent=74 // loop_footer_branch
                  %326 = sbr.rel target = $region84
                $region89: #{tpu_custom_call.1} parent=74 // loop_exit
                  _
              $region75: #{tpu_custom_call.1} parent=59 // pred_fallthru
                _
            $region60: #{tpu_custom_call.1} parent=55 // pred_fallthru
              _
            // Predicated region
            $region61: #{tpu_custom_call.1} parent=55 // pred_check
              _
            $region62: #{tpu_custom_call.1} parent=55 // pred_check_branch
              %297 = sbr.rel (0) target = $region64
            $region63: #{tpu_custom_call.1} parent=55 // pred_region
              loop: start=0, step=1, limit=1
              $region65: #{tpu_custom_call.1} parent=63 // loop_pre_header
                _
              $region66: #{tpu_custom_call.1} parent=63 // loop_header
                %s300 = sphi 0, %s304
                %p301 = scmp.ge.s32.totalorder %s300, 1
                %s305 = sphi %s291, %s291
                %s306 = sphi %s289, %s289
              $region67: #{tpu_custom_call.1} parent=63 // loop_header_branch
                %303 = sbr.rel (%p301) target = $region71
              $region68: #{tpu_custom_call.1} parent=63 // loop_body
                %v307 = vld [vmem:[%s305] sm:$0xf]
                %308 = vst [vmem:[%s306] sm:$0xf] %v307
                %v309 = vld [vmem:[%s305 + $0x8] sm:$0xf]
                %310 = vst [vmem:[%s306 + $0x4] sm:$0xf] %v309
                %v311 = vld [vmem:[%s305 + $0x10] sm:$0xf]
                %312 = vst [vmem:[%s306 + $0x8] sm:$0xf] %v311
                %v313 = vld [vmem:[%s305 + $0x18] sm:$0xf]
                %314 = vst [vmem:[%s306 + $0xc] sm:$0xf] %v313
              $region69: #{tpu_custom_call.1} parent=63 // loop_footer
                %s304 = sadd.s32 1, %s300
              $region70: #{tpu_custom_call.1} parent=63 // loop_footer_branch
                %299 = sbr.rel target = $region66
              $region71: #{tpu_custom_call.1} parent=63 // loop_exit
                _
            $region64: #{tpu_custom_call.1} parent=55 // pred_fallthru
              _
          $region56: #{tpu_custom_call.1} parent=51 // pred_fallthru
            _
          %342 = vnop
        $region52: #{tpu_custom_call.1} parent=47 // pred_fallthru
          _
      $region48: #{tpu_custom_call.1} parent=5 // pred_fallthru
        _
      %p343 = scmp.le.s32.totalorder 1, %s20
      %p344 = scmp.lt.s32.totalorder %s20, 3
      %p345 = pnand %p343, %p344
      %p346 = pneg %p345
      // Predicated region
      $region90: #{tpu_custom_call.1} parent=5 // pred_check
        _
      $region91: #{tpu_custom_call.1} parent=5 // pred_check_branch
        %348 = sbr.rel (%p345) target = $region93
      $region92: #{tpu_custom_call.1} parent=5 // pred_region
        %s349 = ssub.s32 %s20, 1
        %s350 = sand.u32 %s33, 1
        %s351 = sand.u32 %s33, 1
        %s352 = smul.addr %s351, 16
        %s353 = scalar_lea.vmem [#allocation3], %s352
        // Predicated region
        $region94: #{tpu_custom_call.1} parent=92 // pred_check
          %p354 = pneg %p46
        $region95: #{tpu_custom_call.1} parent=92 // pred_check_branch
          %356 = sbr.rel (%p354) target = $region97
        $region96: #{tpu_custom_call.1} parent=92 // pred_region
          _
        $region97: #{tpu_custom_call.1} parent=92 // pred_fallthru
          _
        %s357 = sand.u32 %s33, 1
        %s358 = sand.u32 %s33, 1
        %s359 = smul.addr %s358, 16
        %s360 = scalar_lea.vmem [#allocation3], %s359
        %p361 = pneg %p46
        %p362 = pneg %p43
        %p363 = pneg %p67
        %p364 = pneg %p64
        %p365 = pneg %p88
        %p366 = pneg %p85
        %p367 = pneg %p109
        %p368 = pneg %p106
        %p369 = pneg %p130
        %p370 = pneg %p127
        %p371 = pneg %p151
        %p372 = pneg %p148
        %p373 = pneg %p172
        %p374 = pneg %p169
        %p375 = pneg %p193
        %p376 = pneg %p190
        %p377 = pneg %p214
        %p378 = pneg %p211
        %p379 = pneg %p240
        %p380 = pneg %p237
        %s381 = sand.u32 %s227, 1
        %s382 = scalar_lea.sflag [#allocation5], %s381
        %s383 = sand.u32 %s227, 1
        %s384 = scalar_lea.vmem [#allocation4], %s383
        %v386 = vld [vmem:[%s1] sm:$0xf]
        %v387 = vld [vmem:[%s1 + $0x4] sm:$0xf]
        %v388 = vld [vmem:[%s1 + $0x8] sm:$0xf]
        %v389 = vld [vmem:[%s1 + $0xc] sm:$0xf]
        %v390 = vld [vmem:[%s1 + $0x10] sm:$0xf]
        %v391 = vld [vmem:[%s1 + $0x14] sm:$0xf]
        %v392 = vld [vmem:[%s1 + $0x18] sm:$0xf]
        %v393 = vld [vmem:[%s1 + $0x1c] sm:$0xf]
        %v394 = vld [vmem:[%s1 + $0x20] sm:$0xf]
        %v395 = vld [vmem:[%s1 + $0x24] sm:$0xf]
        %v396 = vld [vmem:[%s1 + $0x28] sm:$0xf]
        %v397 = vld [vmem:[%s1 + $0x2c] sm:$0xf]
        %v398 = vld [vmem:[%s1 + $0x30] sm:$0xf]
        %v399 = vld [vmem:[%s1 + $0x34] sm:$0xf]
        %v400 = vld [vmem:[%s1 + $0x38] sm:$0xf]
        %v401 = vld [vmem:[%s1 + $0x3c] sm:$0xf]
        %v402 = vld [vmem:[%s1 + $0x40] sm:$0xf]
        %v403 = vld [vmem:[%s1 + $0x44] sm:$0xf]
        %v404 = vld [vmem:[%s1 + $0x48] sm:$0xf]
        %v405 = vld [vmem:[%s1 + $0x4c] sm:$0xf]
        %v406 = vld [vmem:[%s1 + $0x50] sm:$0xf]
        %v407 = vld [vmem:[%s1 + $0x54] sm:$0xf]
        %v408 = vld [vmem:[%s1 + $0x58] sm:$0xf]
        %v409 = vld [vmem:[%s1 + $0x5c] sm:$0xf]
        %v410 = vld [vmem:[%s353] sm:$0xf]
        %v411 = vld [vmem:[%s353 + $0x4] sm:$0xf]
        %v412 = vld [vmem:[%s353 + $0x8] sm:$0xf]
        %v413 = vld [vmem:[%s353 + $0xc] sm:$0xf]
        %v414 = vld [vmem:[%s2] sm:$0xff]
        %v415 = vld [vmem:[%s2 + $0x8] sm:$0xff]
        %v416 = vld [vmem:[%s2 + $0x10] sm:$0xff]
        %v417 = vld [vmem:[%s2 + $0x18] sm:$0xff]
        %v418 = vld [vmem:[%s2 + $0x20] sm:$0xff]
        %v419 = vld [vmem:[%s2 + $0x28] sm:$0xff]
        %v420 = vld [vmem:[%s2 + $0x30] sm:$0xff]
        %v421 = vld [vmem:[%s2 + $0x38] sm:$0xff]
        %v422 = vld [vmem:[%s2 + $0x40] sm:$0xff]
        %v423 = vld [vmem:[%s2 + $0x48] sm:$0xff]
        %v424 = vld [vmem:[%s2 + $0x50] sm:$0xff]
        %v425 = vld [vmem:[%s2 + $0x58] sm:$0xff]
        %v426 = vld [vmem:[%s2 + $0x60] sm:$0xff]
        %v427 = vld [vmem:[%s2 + $0x68] sm:$0xff]
        %v428 = vld [vmem:[%s2 + $0x70] sm:$0xff]
        %v429 = vld [vmem:[%s2 + $0x78] sm:$0xff]
        %v430 = vld [vmem:[%s2 + $0x80] sm:$0xff]
        %v431 = vld [vmem:[%s2 + $0x88] sm:$0xff]
        %v432 = vld [vmem:[%s2 + $0x90] sm:$0xff]
        %v433 = vld [vmem:[%s2 + $0x98] sm:$0xff]
        %v434 = vld [vmem:[%s2 + $0xa0] sm:$0xff]
        %v435 = vld [vmem:[%s2 + $0xa8] sm:$0xff]
        %v436 = vld [vmem:[%s2 + $0xb0] sm:$0xff]
        %v437 = vld [vmem:[%s2 + $0xb8] sm:$0xff]
        %439 = vset.pattern.permute.xlu0 0
        %440 = vperm.xlu0 %439, %v414
        %v441 = vpop.permute.xlu0 %440
        %444 = vset.pattern.permute.xlu0 0
        %445 = vperm.xlu0 %444, %v415
        %v446 = vpop.permute.xlu0 %445
        %449 = vset.pattern.permute.xlu0 0
        %450 = vperm.xlu0 %449, %v416
        %v451 = vpop.permute.xlu0 %450
        %454 = vset.pattern.permute.xlu0 0
        %455 = vperm.xlu0 %454, %v417
        %v456 = vpop.permute.xlu0 %455
        %459 = vset.pattern.permute.xlu0 0
        %460 = vperm.xlu0 %459, %v418
        %v461 = vpop.permute.xlu0 %460
        %464 = vset.pattern.permute.xlu0 0
        %465 = vperm.xlu0 %464, %v419
        %v466 = vpop.permute.xlu0 %465
        %469 = vset.pattern.permute.xlu0 0
        %470 = vperm.xlu0 %469, %v420
        %v471 = vpop.permute.xlu0 %470
        %474 = vset.pattern.permute.xlu0 0
        %475 = vperm.xlu0 %474, %v421
        %v476 = vpop.permute.xlu0 %475
        %479 = vset.pattern.permute.xlu0 0
        %480 = vperm.xlu0 %479, %v422
        %v481 = vpop.permute.xlu0 %480
        %484 = vset.pattern.permute.xlu0 0
        %485 = vperm.xlu0 %484, %v423
        %v486 = vpop.permute.xlu0 %485
        %489 = vset.pattern.permute.xlu0 0
        %490 = vperm.xlu0 %489, %v424
        %v491 = vpop.permute.xlu0 %490
        %494 = vset.pattern.permute.xlu0 0
        %495 = vperm.xlu0 %494, %v425
        %v496 = vpop.permute.xlu0 %495
        %499 = vset.pattern.permute.xlu0 0
        %500 = vperm.xlu0 %499, %v426
        %v501 = vpop.permute.xlu0 %500
        %504 = vset.pattern.permute.xlu0 0
        %505 = vperm.xlu0 %504, %v427
        %v506 = vpop.permute.xlu0 %505
        %509 = vset.pattern.permute.xlu0 0
        %510 = vperm.xlu0 %509, %v428
        %v511 = vpop.permute.xlu0 %510
        %514 = vset.pattern.permute.xlu0 0
        %515 = vperm.xlu0 %514, %v429
        %v516 = vpop.permute.xlu0 %515
        %519 = vset.pattern.permute.xlu0 0
        %520 = vperm.xlu0 %519, %v430
        %v521 = vpop.permute.xlu0 %520
        %524 = vset.pattern.permute.xlu0 0
        %525 = vperm.xlu0 %524, %v431
        %v526 = vpop.permute.xlu0 %525
        %529 = vset.pattern.permute.xlu0 0
        %530 = vperm.xlu0 %529, %v432
        %v531 = vpop.permute.xlu0 %530
        %534 = vset.pattern.permute.xlu0 0
        %535 = vperm.xlu0 %534, %v433
        %v536 = vpop.permute.xlu0 %535
        %539 = vset.pattern.permute.xlu0 0
        %540 = vperm.xlu0 %539, %v434
        %v541 = vpop.permute.xlu0 %540
        %544 = vset.pattern.permute.xlu0 0
        %545 = vperm.xlu0 %544, %v435
        %v546 = vpop.permute.xlu0 %545
        %549 = vset.pattern.permute.xlu0 0
        %550 = vperm.xlu0 %549, %v436
        %v551 = vpop.permute.xlu0 %550
        %554 = vset.pattern.permute.xlu0 0
        %555 = vperm.xlu0 %554, %v437
        %v556 = vpop.permute.xlu0 %555
        %v582 = vunpack.c.l.b16 %v386
        %v583 = vunpack.c.l.b16 %v387
        %v584 = vunpack.c.l.b16 %v388
        %v585 = vunpack.c.l.b16 %v389
        %v586 = vunpack.c.l.b16 %v390
        %v587 = vunpack.c.l.b16 %v391
        %v588 = vunpack.c.l.b16 %v392
        %v589 = vunpack.c.l.b16 %v393
        %v590 = vunpack.c.l.b16 %v394
        %v591 = vunpack.c.l.b16 %v395
        %v592 = vunpack.c.l.b16 %v396
        %v593 = vunpack.c.l.b16 %v397
        %v594 = vunpack.c.l.b16 %v398
        %v595 = vunpack.c.l.b16 %v399
        %v596 = vunpack.c.l.b16 %v400
        %v597 = vunpack.c.l.b16 %v401
        %v598 = vunpack.c.l.b16 %v402
        %v599 = vunpack.c.l.b16 %v403
        %v600 = vunpack.c.l.b16 %v404
        %v601 = vunpack.c.l.b16 %v405
        %v602 = vunpack.c.l.b16 %v406
        %v603 = vunpack.c.l.b16 %v407
        %v604 = vunpack.c.l.b16 %v408
        %v605 = vunpack.c.l.b16 %v409
        %v606 = vpack.c.b16 %v583, %v582
        %v607 = vpack.c.b16 %v585, %v584
        %v608 = vpack.c.b16 %v587, %v586
        %v609 = vpack.c.b16 %v589, %v588
        %v610 = vpack.c.b16 %v591, %v590
        %v611 = vpack.c.b16 %v593, %v592
        %v612 = vpack.c.b16 %v595, %v594
        %v613 = vpack.c.b16 %v597, %v596
        %v614 = vpack.c.b16 %v599, %v598
        %v615 = vpack.c.b16 %v601, %v600
        %v616 = vpack.c.b16 %v603, %v602
        %v617 = vpack.c.b16 %v605, %v604
        %v622 = vunpack.c.l.b16 %v410
        %v623 = vunpack.c.l.b16 %v411
        %v624 = vunpack.c.l.b16 %v412
        %v625 = vunpack.c.l.b16 %v413
        %v626 = vpack.c.b16 %v623, %v622
        %v627 = vpack.c.b16 %v625, %v624
        %vm630 = vcmask 261120
        %v632 = vsel %vm630, %v606, 0
        %v635 = vsel %vm630, %v607, 0
        %v638 = vsel %vm630, %v608, 0
        %v641 = vsel %vm630, %v609, 0
        %v644 = vsel %vm630, %v610, 0
        %v647 = vsel %vm630, %v611, 0
        %v650 = vsel %vm630, %v612, 0
        %v653 = vsel %vm630, %v613, 0
        %v656 = vsel %vm630, %v614, 0
        %v659 = vsel %vm630, %v615, 0
        %v662 = vsel %vm630, %v616, 0
        %v665 = vsel %vm630, %v617, 0
        %667 = vmatprep.subr.bf16.mxu0 0
        %668 = vmatpush1.bf16.msra.mxu0 %v626
        %669 = vmatprep.subr.bf16.mxu0 0
        %670 = vmatpush1.bf16.msra.mxu0 %v627
        %671 = vmatprep.subr.bf16.mxu0 0
        %672 = vmatpush1.bf16.msra.mxu0 0
        %673 = vmatprep.subr.bf16.mxu0 0
        %674 = vmatpush1.bf16.msra.mxu0 0
        %675 = vmatprep.subr.bf16.mxu0 0
        %676 = vmatpush1.bf16.msra.mxu0 0
        %677 = vmatprep.subr.bf16.mxu0 0
        %678 = vmatpush1.bf16.msra.mxu0 0
        %679 = vmatprep.subr.bf16.mxu0 0
        %680 = vmatpush1.bf16.msra.mxu0 0
        %681 = vmatprep.subr.bf16.mxu0 0
        %682 = vmatpush1.bf16.msra.mxu0 0
        %683 = vmatprep.subr.bf16.mxu0 0
        %684 = vmatpush1.bf16.msra.mxu0 0
        %685 = vmatprep.subr.bf16.mxu0 0
        %686 = vmatpush1.bf16.msra.mxu0 0
        %687 = vmatprep.subr.bf16.mxu0 0
        %688 = vmatpush1.bf16.msra.mxu0 0
        %689 = vmatprep.subr.bf16.mxu0 0
        %690 = vmatpush1.bf16.msra.mxu0 0
        %691 = vmatprep.subr.bf16.mxu0 0
        %692 = vmatpush1.bf16.msra.mxu0 0
        %693 = vmatprep.subr.bf16.mxu0 0
        %694 = vmatpush1.bf16.msra.mxu0 0
        %695 = vmatprep.subr.bf16.mxu0 0
        %696 = vmatpush1.bf16.msra.mxu0 0
        %697 = vmatprep.subr.bf16.mxu0 0
        %698 = vmatpush1.bf16.msra.mxu0 0
        %699 = vmatprep.mubr.bf16.mxu0 0
        %700 = vmatmul.mubr.bf16.gmra.mrb[0].mxu0 %v632
        %v701 = vpop.f32.mrb[0].mxu0
        %v702 = vadd.f32 %v441, %v701
        %v703 = vpop.f32.mrb[0].mxu0
        %v704 = vpop.f32.mrb[0].mxu0
        %v705 = vadd.f32 %v446, %v704
        %v706 = vpop.f32.mrb[0].mxu0
        %707 = vmatprep.mubr.bf16.mxu0 0
        %708 = vmatmul.mubr.bf16.gmra.mrb[0].mxu0 %v635
        %v709 = vpop.f32.mrb[0].mxu0
        %v710 = vadd.f32 %v451, %v709
        %v711 = vpop.f32.mrb[0].mxu0
        %v712 = vpop.f32.mrb[0].mxu0
        %v713 = vadd.f32 %v456, %v712
        %v714 = vpop.f32.mrb[0].mxu0
        %715 = vmatprep.mubr.bf16.mxu0 0
        %716 = vmatmul.mubr.bf16.gmra.mrb[0].mxu0 %v638
        %v717 = vpop.f32.mrb[0].mxu0
        %v718 = vadd.f32 %v461, %v717
        %v719 = vpop.f32.mrb[0].mxu0
        %v720 = vpop.f32.mrb[0].mxu0
        %v721 = vadd.f32 %v466, %v720
        %v722 = vpop.f32.mrb[0].mxu0
        %723 = vmatprep.mubr.bf16.mxu0 0
        %724 = vmatmul.mubr.bf16.gmra.mrb[0].mxu0 %v641
        %v725 = vpop.f32.mrb[0].mxu0
        %v726 = vadd.f32 %v471, %v725
        %v727 = vpop.f32.mrb[0].mxu0
        %v728 = vpop.f32.mrb[0].mxu0
        %v729 = vadd.f32 %v476, %v728
        %v730 = vpop.f32.mrb[0].mxu0
        %731 = vmatprep.mubr.bf16.mxu0 0
        %732 = vmatmul.mubr.bf16.gmra.mrb[0].mxu0 %v644
        %v733 = vpop.f32.mrb[0].mxu0
        %v734 = vadd.f32 %v481, %v733
        %v735 = vpop.f32.mrb[0].mxu0
        %v736 = vpop.f32.mrb[0].mxu0
        %v737 = vadd.f32 %v486, %v736
        %v738 = vpop.f32.mrb[0].mxu0
        %739 = vmatprep.mubr.bf16.mxu0 0
        %740 = vmatmul.mubr.bf16.gmra.mrb[0].mxu0 %v647
        %v741 = vpop.f32.mrb[0].mxu0
        %v742 = vadd.f32 %v491, %v741
        %v743 = vpop.f32.mrb[0].mxu0
        %v744 = vpop.f32.mrb[0].mxu0
        %v745 = vadd.f32 %v496, %v744
        %v746 = vpop.f32.mrb[0].mxu0
        %747 = vmatprep.mubr.bf16.mxu0 0
        %748 = vmatmul.mubr.bf16.gmra.mrb[0].mxu0 %v650
        %v749 = vpop.f32.mrb[0].mxu0
        %v750 = vadd.f32 %v501, %v749
        %v751 = vpop.f32.mrb[0].mxu0
        %v752 = vpop.f32.mrb[0].mxu0
        %v753 = vadd.f32 %v506, %v752
        %v754 = vpop.f32.mrb[0].mxu0
        %755 = vmatprep.mubr.bf16.mxu0 0
        %756 = vmatmul.mubr.bf16.gmra.mrb[0].mxu0 %v653
        %v757 = vpop.f32.mrb[0].mxu0
        %v758 = vadd.f32 %v511, %v757
        %v759 = vpop.f32.mrb[0].mxu0
        %v760 = vpop.f32.mrb[0].mxu0
        %v761 = vadd.f32 %v516, %v760
        %v762 = vpop.f32.mrb[0].mxu0
        %763 = vmatprep.mubr.bf16.mxu0 0
        %764 = vmatmul.mubr.bf16.gmra.mrb[0].mxu0 %v656
        %v765 = vpop.f32.mrb[0].mxu0
        %v766 = vadd.f32 %v521, %v765
        %v767 = vpop.f32.mrb[0].mxu0
        %v768 = vpop.f32.mrb[0].mxu0
        %v769 = vadd.f32 %v526, %v768
        %v770 = vpop.f32.mrb[0].mxu0
        %771 = vmatprep.mubr.bf16.mxu0 0
        %772 = vmatmul.mubr.bf16.gmra.mrb[0].mxu0 %v659
        %v773 = vpop.f32.mrb[0].mxu0
        %v774 = vadd.f32 %v531, %v773
        %v775 = vpop.f32.mrb[0].mxu0
        %v776 = vpop.f32.mrb[0].mxu0
        %v777 = vadd.f32 %v536, %v776
        %v778 = vpop.f32.mrb[0].mxu0
        %779 = vmatprep.mubr.bf16.mxu0 0
        %780 = vmatmul.mubr.bf16.gmra.mrb[0].mxu0 %v662
        %v781 = vpop.f32.mrb[0].mxu0
        %v782 = vadd.f32 %v541, %v781
        %v783 = vpop.f32.mrb[0].mxu0
        %v784 = vpop.f32.mrb[0].mxu0
        %v785 = vadd.f32 %v546, %v784
        %v786 = vpop.f32.mrb[0].mxu0
        %787 = vmatprep.mubr.bf16.mxu0 0
        %788 = vmatmul.mubr.bf16.gmra.mrb[0].mxu0 %v665
        %v789 = vpop.f32.mrb[0].mxu0
        %v790 = vadd.f32 %v551, %v789
        %v791 = vpop.f32.mrb[0].mxu0
        %v792 = vpop.f32.mrb[0].mxu0
        %v793 = vadd.f32 %v556, %v792
        %v794 = vpop.f32.mrb[0].mxu0
        %795 = vdwg.mxu0
        %v796 = vmax.f32 %v702, 0.0
        %v797 = vmax.f32 %v705, 0.0
        %v798 = vmax.f32 %v710, 0.0
        %v799 = vmax.f32 %v713, 0.0
        %v800 = vmax.f32 %v718, 0.0
        %v801 = vmax.f32 %v721, 0.0
        %v802 = vmax.f32 %v726, 0.0
        %v803 = vmax.f32 %v729, 0.0
        %v804 = vmax.f32 %v734, 0.0
        %v805 = vmax.f32 %v737, 0.0
        %v806 = vmax.f32 %v742, 0.0
        %v807 = vmax.f32 %v745, 0.0
        %v808 = vmax.f32 %v750, 0.0
        %v809 = vmax.f32 %v753, 0.0
        %v810 = vmax.f32 %v758, 0.0
        %v811 = vmax.f32 %v761, 0.0
        %v812 = vmax.f32 %v766, 0.0
        %v813 = vmax.f32 %v769, 0.0
        %v814 = vmax.f32 %v774, 0.0
        %v815 = vmax.f32 %v777, 0.0
        %v816 = vmax.f32 %v782, 0.0
        %v817 = vmax.f32 %v785, 0.0
        %v818 = vmax.f32 %v790, 0.0
        %v819 = vmax.f32 %v793, 0.0
        %v820 = vld [vmem:[%s3] sm:$0xff]
        %v821 = vld [vmem:[%s3 + $0x8] sm:$0xff]
        %v822 = vld [vmem:[%s3 + $0x10] sm:$0xff]
        %v823 = vld [vmem:[%s3 + $0x18] sm:$0xff]
        %v824 = vld [vmem:[%s3 + $0x20] sm:$0xff]
        %v825 = vld [vmem:[%s3 + $0x28] sm:$0xff]
        %v826 = vld [vmem:[%s3 + $0x30] sm:$0xff]
        %v827 = vld [vmem:[%s3 + $0x38] sm:$0xff]
        %v828 = vld [vmem:[%s3 + $0x40] sm:$0xff]
        %v829 = vld [vmem:[%s3 + $0x48] sm:$0xff]
        %v830 = vld [vmem:[%s3 + $0x50] sm:$0xff]
        %v831 = vld [vmem:[%s3 + $0x58] sm:$0xff]
        %v832 = vld [vmem:[%s3 + $0x60] sm:$0xff]
        %v833 = vld [vmem:[%s3 + $0x68] sm:$0xff]
        %v834 = vld [vmem:[%s3 + $0x70] sm:$0xff]
        %v835 = vld [vmem:[%s3 + $0x78] sm:$0xff]
        %v836 = vpack.c.bf16 %v797, %v796
        %v837 = vpack.c.bf16 %v799, %v798
        %v838 = vpack.c.bf16 %v801, %v800
        %v839 = vpack.c.bf16 %v803, %v802
        %v840 = vpack.c.bf16 %v805, %v804
        %v841 = vpack.c.bf16 %v807, %v806
        %v842 = vpack.c.bf16 %v809, %v808
        %v843 = vpack.c.bf16 %v811, %v810
        %v844 = vpack.c.bf16 %v813, %v812
        %v845 = vpack.c.bf16 %v815, %v814
        %v846 = vpack.c.bf16 %v817, %v816
        %v847 = vpack.c.bf16 %v819, %v818
        %v848 = vld [vmem:[%s4] sm:$0xff]
        %v849 = vld [vmem:[%s4 + $0x8] sm:$0xff]
        %v850 = vld [vmem:[%s4 + $0x10] sm:$0xff]
        %v851 = vld [vmem:[%s4 + $0x18] sm:$0xff]
        %v852 = vld [vmem:[%s4 + $0x20] sm:$0xff]
        %v853 = vld [vmem:[%s4 + $0x28] sm:$0xff]
        %v854 = vld [vmem:[%s4 + $0x30] sm:$0xff]
        %v855 = vld [vmem:[%s4 + $0x38] sm:$0xff]
        %v856 = vld [vmem:[%s4 + $0x40] sm:$0xff]
        %v857 = vld [vmem:[%s4 + $0x48] sm:$0xff]
        %v858 = vld [vmem:[%s4 + $0x50] sm:$0xff]
        %v859 = vld [vmem:[%s4 + $0x58] sm:$0xff]
        %v860 = vld [vmem:[%s4 + $0x60] sm:$0xff]
        %v861 = vld [vmem:[%s4 + $0x68] sm:$0xff]
        %v862 = vld [vmem:[%s4 + $0x70] sm:$0xff]
        %v863 = vld [vmem:[%s4 + $0x78] sm:$0xff]
        %865 = vset.pattern.permute.xlu0 0
        %866 = vperm.xlu0 %865, %v848
        %v867 = vpop.permute.xlu0 %866
        %870 = vset.pattern.permute.xlu0 0
        %871 = vperm.xlu0 %870, %v849
        %v872 = vpop.permute.xlu0 %871
        %875 = vset.pattern.permute.xlu0 0
        %876 = vperm.xlu0 %875, %v850
        %v877 = vpop.permute.xlu0 %876
        %880 = vset.pattern.permute.xlu0 0
        %881 = vperm.xlu0 %880, %v851
        %v882 = vpop.permute.xlu0 %881
        %885 = vset.pattern.permute.xlu0 0
        %886 = vperm.xlu0 %885, %v852
        %v887 = vpop.permute.xlu0 %886
        %890 = vset.pattern.permute.xlu0 0
        %891 = vperm.xlu0 %890, %v853
        %v892 = vpop.permute.xlu0 %891
        %895 = vset.pattern.permute.xlu0 0
        %896 = vperm.xlu0 %895, %v854
        %v897 = vpop.permute.xlu0 %896
        %900 = vset.pattern.permute.xlu0 0
        %901 = vperm.xlu0 %900, %v855
        %v902 = vpop.permute.xlu0 %901
        %905 = vset.pattern.permute.xlu0 0
        %906 = vperm.xlu0 %905, %v856
        %v907 = vpop.permute.xlu0 %906
        %910 = vset.pattern.permute.xlu0 0
        %911 = vperm.xlu0 %910, %v857
        %v912 = vpop.permute.xlu0 %911
        %915 = vset.pattern.permute.xlu0 0
        %916 = vperm.xlu0 %915, %v858
        %v917 = vpop.permute.xlu0 %916
        %920 = vset.pattern.permute.xlu0 0
        %921 = vperm.xlu0 %920, %v859
        %v922 = vpop.permute.xlu0 %921
        %925 = vset.pattern.permute.xlu0 0
        %926 = vperm.xlu0 %925, %v860
        %v927 = vpop.permute.xlu0 %926
        %930 = vset.pattern.permute.xlu0 0
        %931 = vperm.xlu0 %930, %v861
        %v932 = vpop.permute.xlu0 %931
        %935 = vset.pattern.permute.xlu0 0
        %936 = vperm.xlu0 %935, %v862
        %v937 = vpop.permute.xlu0 %936
        %940 = vset.pattern.permute.xlu0 0
        %941 = vperm.xlu0 %940, %v863
        %v942 = vpop.permute.xlu0 %941
        %v960 = vunpack.c.l.b16 %v820
        %v961 = vunpack.c.h.b16 %v820
        %v962 = vunpack.c.l.b16 %v821
        %v963 = vunpack.c.h.b16 %v821
        %v964 = vunpack.c.l.b16 %v822
        %v965 = vunpack.c.h.b16 %v822
        %v966 = vunpack.c.l.b16 %v823
        %v967 = vunpack.c.h.b16 %v823
        %v968 = vunpack.c.l.b16 %v824
        %v969 = vunpack.c.h.b16 %v824
        %v970 = vunpack.c.l.b16 %v825
        %v971 = vunpack.c.h.b16 %v825
        %v972 = vunpack.c.l.b16 %v826
        %v973 = vunpack.c.h.b16 %v826
        %v974 = vunpack.c.l.b16 %v827
        %v975 = vunpack.c.h.b16 %v827
        %v976 = vunpack.c.l.b16 %v828
        %v977 = vunpack.c.h.b16 %v828
        %v978 = vunpack.c.l.b16 %v829
        %v979 = vunpack.c.h.b16 %v829
        %v980 = vunpack.c.l.b16 %v830
        %v981 = vunpack.c.h.b16 %v830
        %v982 = vunpack.c.l.b16 %v831
        %v983 = vunpack.c.h.b16 %v831
        %v984 = vunpack.c.l.b16 %v832
        %v985 = vunpack.c.h.b16 %v832
        %v986 = vunpack.c.l.b16 %v833
        %v987 = vunpack.c.h.b16 %v833
        %v988 = vunpack.c.l.b16 %v834
        %v989 = vunpack.c.h.b16 %v834
        %v990 = vunpack.c.l.b16 %v835
        %v991 = vunpack.c.h.b16 %v835
        %v992 = vpack.c.b16 %v962, %v960
        %v993 = vpack.c.b16 %v963, %v961
        %v994 = vpack.c.b16 %v966, %v964
        %v995 = vpack.c.b16 %v967, %v965
        %v996 = vpack.c.b16 %v970, %v968
        %v997 = vpack.c.b16 %v971, %v969
        %v998 = vpack.c.b16 %v974, %v972
        %v999 = vpack.c.b16 %v975, %v973
        %v1000 = vpack.c.b16 %v978, %v976
        %v1001 = vpack.c.b16 %v979, %v977
        %v1002 = vpack.c.b16 %v982, %v980
        %v1003 = vpack.c.b16 %v983, %v981
        %v1004 = vpack.c.b16 %v986, %v984
        %v1005 = vpack.c.b16 %v987, %v985
        %v1006 = vpack.c.b16 %v990, %v988
        %v1007 = vpack.c.b16 %v991, %v989
        %vm1016 = vcmask 523264
        %v1018 = vsel %vm1016, %v993, 0
        %v1021 = vsel %vm1016, %v995, 0
        %v1024 = vsel %vm1016, %v997, 0
        %v1027 = vsel %vm1016, %v999, 0
        %v1030 = vsel %vm1016, %v1001, 0
        %v1033 = vsel %vm1016, %v1003, 0
        %v1036 = vsel %vm1016, %v1005, 0
        %v1039 = vsel %vm1016, %v1007, 0
        %1041 = vmatprep.subr.bf16.mxu0 0
        %1042 = vmatpush1.bf16.msra.mxu0 %v836
        %1043 = vmatprep.subr.bf16.mxu0 0
        %1044 = vmatpush1.bf16.msra.mxu0 %v837
        %1045 = vmatprep.subr.bf16.mxu0 0
        %1046 = vmatpush1.bf16.msra.mxu0 %v838
        %1047 = vmatprep.subr.bf16.mxu0 0
        %1048 = vmatpush1.bf16.msra.mxu0 %v839
        %1049 = vmatprep.subr.bf16.mxu0 0
        %1050 = vmatpush1.bf16.msra.mxu0 %v840
        %1051 = vmatprep.subr.bf16.mxu0 0
        %1052 = vmatpush1.bf16.msra.mxu0 %v841
        %1053 = vmatprep.subr.bf16.mxu0 0
        %1054 = vmatpush1.bf16.msra.mxu0 %v842
        %1055 = vmatprep.subr.bf16.mxu0 0
        %1056 = vmatpush1.bf16.msra.mxu0 %v843
        %1057 = vmatprep.subr.bf16.mxu0 0
        %1058 = vmatpush1.bf16.msra.mxu0 %v844
        %1059 = vmatprep.subr.bf16.mxu0 0
        %1060 = vmatpush1.bf16.msra.mxu0 %v845
        %1061 = vmatprep.subr.bf16.mxu0 0
        %1062 = vmatpush1.bf16.msra.mxu0 %v846
        %1063 = vmatprep.subr.bf16.mxu0 0
        %1064 = vmatpush1.bf16.msra.mxu0 %v847
        %1065 = vmatprep.subr.bf16.mxu0 0
        %1066 = vmatpush1.bf16.msra.mxu0 0
        %1067 = vmatprep.subr.bf16.mxu0 0
        %1068 = vmatpush1.bf16.msra.mxu0 0
        %1069 = vmatprep.subr.bf16.mxu0 0
        %1070 = vmatpush1.bf16.msra.mxu0 0
        %1071 = vmatprep.subr.bf16.mxu0 0
        %1072 = vmatpush1.bf16.msra.mxu0 0
        %1073 = vmatprep.mubr.bf16.mxu0 %v1018
        %1074 = vmatmul.mubr.bf16.gmra.mrb[0].mxu0 %v992
        %v1075 = vpop.f32.mrb[0].mxu0
        %v1076 = vadd.f32 %v867, %v1075
        %v1077 = vpop.f32.mrb[0].mxu0
        %v1078 = vpop.f32.mrb[0].mxu0
        %v1079 = vadd.f32 %v872, %v1078
        %v1080 = vpop.f32.mrb[0].mxu0
        %1081 = vmatprep.mubr.bf16.mxu0 %v1021
        %1082 = vmatmul.mubr.bf16.gmra.mrb[0].mxu0 %v994
        %v1083 = vpop.f32.mrb[0].mxu0
        %v1084 = vadd.f32 %v877, %v1083
        %v1085 = vpop.f32.mrb[0].mxu0
        %v1086 = vpop.f32.mrb[0].mxu0
        %v1087 = vadd.f32 %v882, %v1086
        %v1088 = vpop.f32.mrb[0].mxu0
        %1089 = vmatprep.mubr.bf16.mxu0 %v1024
        %1090 = vmatmul.mubr.bf16.gmra.mrb[0].mxu0 %v996
        %v1091 = vpop.f32.mrb[0].mxu0
        %v1092 = vadd.f32 %v887, %v1091
        %v1093 = vpop.f32.mrb[0].mxu0
        %v1094 = vpop.f32.mrb[0].mxu0
        %v1095 = vadd.f32 %v892, %v1094
        %v1096 = vpop.f32.mrb[0].mxu0
        %1097 = vmatprep.mubr.bf16.mxu0 %v1027
        %1098 = vmatmul.mubr.bf16.gmra.mrb[0].mxu0 %v998
        %v1099 = vpop.f32.mrb[0].mxu0
        %v1100 = vadd.f32 %v897, %v1099
        %v1101 = vpop.f32.mrb[0].mxu0
        %v1102 = vpop.f32.mrb[0].mxu0
        %v1103 = vadd.f32 %v902, %v1102
        %v1104 = vpop.f32.mrb[0].mxu0
        %1105 = vmatprep.mubr.bf16.mxu0 %v1030
        %1106 = vmatmul.mubr.bf16.gmra.mrb[0].mxu0 %v1000
        %v1107 = vpop.f32.mrb[0].mxu0
        %v1108 = vadd.f32 %v907, %v1107
        %v1109 = vpop.f32.mrb[0].mxu0
        %v1110 = vpop.f32.mrb[0].mxu0
        %v1111 = vadd.f32 %v912, %v1110
        %v1112 = vpop.f32.mrb[0].mxu0
        %1113 = vmatprep.mubr.bf16.mxu0 %v1033
        %1114 = vmatmul.mubr.bf16.gmra.mrb[0].mxu0 %v1002
        %v1115 = vpop.f32.mrb[0].mxu0
        %v1116 = vadd.f32 %v917, %v1115
        %v1117 = vpop.f32.mrb[0].mxu0
        %v1118 = vpop.f32.mrb[0].mxu0
        %v1119 = vadd.f32 %v922, %v1118
        %v1120 = vpop.f32.mrb[0].mxu0
        %1121 = vmatprep.mubr.bf16.mxu0 %v1036
        %1122 = vmatmul.mubr.bf16.gmra.mrb[0].mxu0 %v1004
        %v1123 = vpop.f32.mrb[0].mxu0
        %v1124 = vadd.f32 %v927, %v1123
        %v1125 = vpop.f32.mrb[0].mxu0
        %v1126 = vpop.f32.mrb[0].mxu0
        %v1127 = vadd.f32 %v932, %v1126
        %v1128 = vpop.f32.mrb[0].mxu0
        %1129 = vmatprep.mubr.bf16.mxu0 %v1039
        %1130 = vmatmul.mubr.bf16.gmra.mrb[0].mxu0 %v1006
        %v1131 = vpop.f32.mrb[0].mxu0
        %v1132 = vadd.f32 %v937, %v1131
        %v1133 = vpop.f32.mrb[0].mxu0
        %v1134 = vpop.f32.mrb[0].mxu0
        %v1135 = vadd.f32 %v942, %v1134
        %v1136 = vpop.f32.mrb[0].mxu0
        %1137 = vdwg.mxu0
        %v1138 = vmax.f32 %v1076, 0.0
        %v1139 = vmax.f32 %v1079, 0.0
        %v1140 = vmax.f32 %v1084, 0.0
        %v1141 = vmax.f32 %v1087, 0.0
        %v1142 = vmax.f32 %v1092, 0.0
        %v1143 = vmax.f32 %v1095, 0.0
        %v1144 = vmax.f32 %v1100, 0.0
        %v1145 = vmax.f32 %v1103, 0.0
        %v1146 = vmax.f32 %v1108, 0.0
        %v1147 = vmax.f32 %v1111, 0.0
        %v1148 = vmax.f32 %v1116, 0.0
        %v1149 = vmax.f32 %v1119, 0.0
        %v1150 = vmax.f32 %v1124, 0.0
        %v1151 = vmax.f32 %v1127, 0.0
        %v1152 = vmax.f32 %v1132, 0.0
        %v1153 = vmax.f32 %v1135, 0.0
        %v1154 = vld [vmem:[%s5] sm:$0xf]
        %v1155 = vld [vmem:[%s5 + $0x4] sm:$0xf]
        %v1156 = vld [vmem:[%s5 + $0x8] sm:$0xf]
        %v1157 = vld [vmem:[%s5 + $0xc] sm:$0xf]
        %v1158 = vld [vmem:[%s5 + $0x10] sm:$0xf]
        %v1159 = vld [vmem:[%s5 + $0x14] sm:$0xf]
        %v1160 = vld [vmem:[%s5 + $0x18] sm:$0xf]
        %v1161 = vld [vmem:[%s5 + $0x1c] sm:$0xf]
        %v1162 = vpack.c.bf16 %v1139, %v1138
        %v1163 = vpack.c.bf16 %v1141, %v1140
        %v1164 = vpack.c.bf16 %v1143, %v1142
        %v1165 = vpack.c.bf16 %v1145, %v1144
        %v1166 = vpack.c.bf16 %v1147, %v1146
        %v1167 = vpack.c.bf16 %v1149, %v1148
        %v1168 = vpack.c.bf16 %v1151, %v1150
        %v1169 = vpack.c.bf16 %v1153, %v1152
        %v1170 = vld [vmem:[%s6] sm:$0xff]
        %v1171 = vld [vmem:[%s6 + $0x8] sm:$0xff]
        %v1172 = vld [vmem:[%s6 + $0x10] sm:$0xff]
        %v1173 = vld [vmem:[%s6 + $0x18] sm:$0xff]
        %v1174 = vld [vmem:[%s6 + $0x20] sm:$0xff]
        %v1175 = vld [vmem:[%s6 + $0x28] sm:$0xff]
        %v1176 = vld [vmem:[%s6 + $0x30] sm:$0xff]
        %v1177 = vld [vmem:[%s6 + $0x38] sm:$0xff]
        %1179 = vset.pattern.permute.xlu0 0
        %1180 = vperm.xlu0 %1179, %v1170
        %v1181 = vpop.permute.xlu0 %1180
        %1184 = vset.pattern.permute.xlu0 0
        %1185 = vperm.xlu0 %1184, %v1171
        %v1186 = vpop.permute.xlu0 %1185
        %1189 = vset.pattern.permute.xlu0 0
        %1190 = vperm.xlu0 %1189, %v1172
        %v1191 = vpop.permute.xlu0 %1190
        %1194 = vset.pattern.permute.xlu0 0
        %1195 = vperm.xlu0 %1194, %v1173
        %v1196 = vpop.permute.xlu0 %1195
        %1199 = vset.pattern.permute.xlu0 0
        %1200 = vperm.xlu0 %1199, %v1174
        %v1201 = vpop.permute.xlu0 %1200
        %1204 = vset.pattern.permute.xlu0 0
        %1205 = vperm.xlu0 %1204, %v1175
        %v1206 = vpop.permute.xlu0 %1205
        %1209 = vset.pattern.permute.xlu0 0
        %1210 = vperm.xlu0 %1209, %v1176
        %v1211 = vpop.permute.xlu0 %1210
        %1214 = vset.pattern.permute.xlu0 0
        %1215 = vperm.xlu0 %1214, %v1177
        %v1216 = vpop.permute.xlu0 %1215
        %v1226 = vunpack.c.l.b16 %v1154
        %v1227 = vunpack.c.l.b16 %v1155
        %v1228 = vunpack.c.l.b16 %v1156
        %v1229 = vunpack.c.l.b16 %v1157
        %v1230 = vunpack.c.l.b16 %v1158
        %v1231 = vunpack.c.l.b16 %v1159
        %v1232 = vunpack.c.l.b16 %v1160
        %v1233 = vunpack.c.l.b16 %v1161
        %v1234 = vpack.c.b16 %v1227, %v1226
        %v1235 = vpack.c.b16 %v1229, %v1228
        %v1236 = vpack.c.b16 %v1231, %v1230
        %v1237 = vpack.c.b16 %v1233, %v1232
        %1242 = vmatprep.subr.bf16.mxu0 0
        %1243 = vmatpush1.bf16.msra.mxu0 %v1162
        %1244 = vmatprep.subr.bf16.mxu0 0
        %1245 = vmatpush1.bf16.msra.mxu0 %v1163
        %1246 = vmatprep.subr.bf16.mxu0 0
        %1247 = vmatpush1.bf16.msra.mxu0 %v1164
        %1248 = vmatprep.subr.bf16.mxu0 0
        %1249 = vmatpush1.bf16.msra.mxu0 %v1165
        %1250 = vmatprep.subr.bf16.mxu0 0
        %1251 = vmatpush1.bf16.msra.mxu0 %v1166
        %1252 = vmatprep.subr.bf16.mxu0 0
        %1253 = vmatpush1.bf16.msra.mxu0 %v1167
        %1254 = vmatprep.subr.bf16.mxu0 0
        %1255 = vmatpush1.bf16.msra.mxu0 %v1168
        %1256 = vmatprep.subr.bf16.mxu0 0
        %1257 = vmatpush1.bf16.msra.mxu0 %v1169
        %1258 = vmatprep.subr.bf16.mxu0 0
        %1259 = vmatpush1.bf16.msra.mxu0 0
        %1260 = vmatprep.subr.bf16.mxu0 0
        %1261 = vmatpush1.bf16.msra.mxu0 0
        %1262 = vmatprep.subr.bf16.mxu0 0
        %1263 = vmatpush1.bf16.msra.mxu0 0
        %1264 = vmatprep.subr.bf16.mxu0 0
        %1265 = vmatpush1.bf16.msra.mxu0 0
        %1266 = vmatprep.subr.bf16.mxu0 0
        %1267 = vmatpush1.bf16.msra.mxu0 0
        %1268 = vmatprep.subr.bf16.mxu0 0
        %1269 = vmatpush1.bf16.msra.mxu0 0
        %1270 = vmatprep.subr.bf16.mxu0 0
        %1271 = vmatpush1.bf16.msra.mxu0 0
        %1272 = vmatprep.subr.bf16.mxu0 0
        %1273 = vmatpush1.bf16.msra.mxu0 0
        %1274 = vmatprep.mubr.bf16.mxu0 0
        %1275 = vmatmul.mubr.bf16.gmra.mrb[0].mxu0 %v1234
        %v1276 = vpop.f32.mrb[0].mxu0
        %v1277 = vadd.f32 %v1181, %v1276
        %v1278 = vpop.f32.mrb[0].mxu0
        %v1279 = vpop.f32.mrb[0].mxu0
        %v1280 = vadd.f32 %v1186, %v1279
        %v1281 = vpop.f32.mrb[0].mxu0
        %1282 = vmatprep.mubr.bf16.mxu0 0
        %1283 = vmatmul.mubr.bf16.gmra.mrb[0].mxu0 %v1235
        %v1284 = vpop.f32.mrb[0].mxu0
        %v1285 = vadd.f32 %v1191, %v1284
        %v1286 = vpop.f32.mrb[0].mxu0
        %v1287 = vpop.f32.mrb[0].mxu0
        %v1288 = vadd.f32 %v1196, %v1287
        %v1289 = vpop.f32.mrb[0].mxu0
        %1290 = vmatprep.mubr.bf16.mxu0 0
        %1291 = vmatmul.mubr.bf16.gmra.mrb[0].mxu0 %v1236
        %v1292 = vpop.f32.mrb[0].mxu0
        %v1293 = vadd.f32 %v1201, %v1292
        %v1294 = vpop.f32.mrb[0].mxu0
        %v1295 = vpop.f32.mrb[0].mxu0
        %v1296 = vadd.f32 %v1206, %v1295
        %v1297 = vpop.f32.mrb[0].mxu0
        %1298 = vmatprep.mubr.bf16.mxu0 0
        %1299 = vmatmul.mubr.bf16.gmra.mrb[0].mxu0 %v1237
        %v1300 = vpop.f32.mrb[0].mxu0
        %v1301 = vadd.f32 %v1211, %v1300
        %v1302 = vpop.f32.mrb[0].mxu0
        %v1303 = vpop.f32.mrb[0].mxu0
        %v1304 = vadd.f32 %v1216, %v1303
        %v1305 = vpop.f32.mrb[0].mxu0
        %1306 = vdwg.mxu0
        %v1307 = vmax.f32 %v1277, 0.0
        %v1308 = vmax.f32 %v1280, 0.0
        %v1309 = vmax.f32 %v1285, 0.0
        %v1310 = vmax.f32 %v1288, 0.0
        %v1311 = vmax.f32 %v1293, 0.0
        %v1312 = vmax.f32 %v1296, 0.0
        %v1313 = vmax.f32 %v1301, 0.0
        %v1314 = vmax.f32 %v1304, 0.0
        %v1315 = vld [vmem:[%s7] sm:$0xff]
        %v1316 = vld [vmem:[%s7 + $0x8] sm:$0xff]
        %v1317 = vld [vmem:[%s7 + $0x10] sm:$0xff]
        %v1318 = vld [vmem:[%s7 + $0x18] sm:$0xff]
        %v1319 = vld [vmem:[%s7 + $0x20] sm:$0xff]
        %v1320 = vld [vmem:[%s7 + $0x28] sm:$0xff]
        %v1321 = vld [vmem:[%s7 + $0x30] sm:$0xff]
        %v1322 = vld [vmem:[%s7 + $0x38] sm:$0xff]
        %1324 = vset.pattern.permute.xlu0 0
        %1325 = vperm.xlu0 %1324, %v1315
        %v1326 = vpop.permute.xlu0 %1325
        %1329 = vset.pattern.permute.xlu0 0
        %1330 = vperm.xlu0 %1329, %v1316
        %v1331 = vpop.permute.xlu0 %1330
        %1334 = vset.pattern.permute.xlu0 0
        %1335 = vperm.xlu0 %1334, %v1317
        %v1336 = vpop.permute.xlu0 %1335
        %1339 = vset.pattern.permute.xlu0 0
        %1340 = vperm.xlu0 %1339, %v1318
        %v1341 = vpop.permute.xlu0 %1340
        %1344 = vset.pattern.permute.xlu0 0
        %1345 = vperm.xlu0 %1344, %v1319
        %v1346 = vpop.permute.xlu0 %1345
        %1349 = vset.pattern.permute.xlu0 0
        %1350 = vperm.xlu0 %1349, %v1320
        %v1351 = vpop.permute.xlu0 %1350
        %1354 = vset.pattern.permute.xlu0 0
        %1355 = vperm.xlu0 %1354, %v1321
        %v1356 = vpop.permute.xlu0 %1355
        %1359 = vset.pattern.permute.xlu0 0
        %1360 = vperm.xlu0 %1359, %v1322
        %v1361 = vpop.permute.xlu0 %1360
        %v1363 = vmul.f32 %v1307, %v1326
        %v1364 = vmul.f32 %v1308, %v1331
        %v1365 = vmul.f32 %v1309, %v1336
        %v1366 = vmul.f32 %v1310, %v1341
        %v1367 = vmul.f32 %v1311, %v1346
        %v1368 = vmul.f32 %v1312, %v1351
        %v1369 = vmul.f32 %v1313, %v1356
        %v1370 = vmul.f32 %v1314, %v1361
        %v1371 = vadd.f32 %v1363, %v1364
        %v1372 = vadd.f32 %v1371, %v1365
        %v1373 = vadd.f32 %v1372, %v1366
        %v1374 = vadd.f32 %v1373, %v1367
        %v1375 = vadd.f32 %v1374, %v1368
        %v1376 = vadd.f32 %v1375, %v1369
        %v1377 = vadd.f32 %v1376, %v1370
        %v1378 = vrot.slane %v1377, 4
        %v1379 = vadd.f32 %v1377, %v1378
        %v1380 = vrot.slane %v1379, 2
        %v1381 = vadd.f32 %v1379, %v1380
        %v1382 = vrot.slane %v1381, 1
        %v1383 = vadd.f32 %v1381, %v1382
        %v1384 = vld [vmem:[#allocation2] sm:$0x1]
        %1386 = vset.pattern.permute.xlu0 0
        %1387 = vperm.xlu0 %1386, %v1384
        %v1388 = vpop.permute.xlu0 %1387
        %v1390 = vlaneseq
        %v1391 = vshrl.u32 %v1390, 7
        %v1392 = vsub.s32 0, %v1391
        %v1393 = vrot.slane %v1388, %v1392
        %v1394 = vadd.f32 %v1383, %v1393
        %1395 = vst [vmem:[%s384] sm:$0x1] %v1394
        %s1396 = sand.u32 %s227, 1
        %s1397 = scalar_lea.sflag [#allocation5], %s1396
        %s1398 = sand.u32 %s227, 1
        %s1399 = scalar_lea.vmem [#allocation4], %s1398
        // Predicated region
        $region98: #{tpu_custom_call.1} parent=92 // pred_check
          %p1400 = pneg %p237
        $region99: #{tpu_custom_call.1} parent=92 // pred_check_branch
          %1402 = sbr.rel (%p1400) target = $region101
        $region100: #{tpu_custom_call.1} parent=92 // pred_region
          %s1404 = ssub.s32 16, 16
          %1405 = vsyncadd %s1397, %s1404
          %s1406 = smul.addr %s25, 16
          %s1407 = scalar_lea.hbm %s9, %s1406
          %s1409 = sshll.u32 %s1399, 4
          %s1410 = int_to_ptr.vmem [resolvable:$true] %s1409
          %1412 = dma.vmem_to_hbm [thread:$0]  %s1410, 16, %s1407, %s1397
        $region101: #{tpu_custom_call.1} parent=92 // pred_fallthru
          _
      $region93: #{tpu_custom_call.1} parent=5 // pred_fallthru
        _
      %p1413 = scmp.le.s32.totalorder 2, %s20
      // Predicated region
      $region102: #{tpu_custom_call.1} parent=5 // pred_check
        %p1414 = pneg %p1413
      $region103: #{tpu_custom_call.1} parent=5 // pred_check_branch
        %1416 = sbr.rel (%p1414) target = $region105
      $region104: #{tpu_custom_call.1} parent=5 // pred_region
        %s1417 = ssub.s32 %s20, 2
        // Predicated region
        $region106: #{tpu_custom_call.1} parent=104 // pred_check
          %p1418 = pneg %p243
        $region107: #{tpu_custom_call.1} parent=104 // pred_check_branch
          %1420 = sbr.rel (%p1418) target = $region109
        $region108: #{tpu_custom_call.1} parent=104 // pred_region
          %s1421 = sand.u32 %s228, 1
          %s1422 = scalar_lea.sflag [#allocation5], %s1421
          %s1423 = sand.u32 %s228, 1
          %s1424 = scalar_lea.vmem [#allocation4], %s1423
          %1425 = dma.done %s1422, 16
        $region109: #{tpu_custom_call.1} parent=104 // pred_fallthru
          _
      $region105: #{tpu_custom_call.1} parent=5 // pred_fallthru
        _
    $region6: #{tpu_custom_call.1} parent=1 // loop_footer
      %s24 = sadd.s32 1, %s20
    $region7: #{tpu_custom_call.1} parent=1 // loop_footer_branch
      %19 = sbr.rel target = $region3
    $region8: #{tpu_custom_call.1} parent=1 // loop_exit
      _
    %1426 = vsyncpa [#allocation5], 1
    %s1427 = scalar_lea.sflag [#allocation5], 1
    %1428 = vsyncpa %s1427, 1

</llo_original>
